<compile_context>
chip_gen: v7x
topology: tpu7x:2x2x1
jax: 0.10.0
libtpu: 0.0.40
codegen_flags: <defaults>
</compile_context>

<pallas_src>
import functools
from collections import OrderedDict

import jax
import jax.numpy as jnp
from jax.experimental import pallas as pl
from jax.experimental.pallas import tpu as pltpu


def _round_up(x, m):
    return (x + m - 1) // m * m


# ------------------------- Pallas kernels -------------------------

def _mm_bias_act_kernel(a_ref, b_ref, bias_ref, o_ref, *, relu):
    # (TM, Kp) bf16 @ (Kp, Np) bf16 -> f32 accum, fused bias (+ ReLU).
    acc = jnp.dot(a_ref[...], b_ref[...], preferred_element_type=jnp.float32)
    acc = acc + bias_ref[...]
    if relu:
        acc = jnp.maximum(acc, 0.0)
    o_ref[...] = acc


def _mm_bias_residual_relu_kernel(a_ref, b_ref, bias_ref, r_ref, o_ref):
    # Final 1x1 conv of a bottleneck: matmul + bias + residual add + ReLU fused.
    acc = jnp.dot(a_ref[...], b_ref[...], preferred_element_type=jnp.float32)
    o_ref[...] = jnp.maximum(acc + bias_ref[...] + r_ref[...], 0.0)


def _max9_kernel(x_ref, o_ref):
    # max over the 9 pooling-window taps (leading axis).
    o_ref[...] = jnp.max(x_ref[...], axis=0)


# ------------------------- Pallas wrappers -------------------------

def matmul_bias_act(a, b_bf16, bias, *, relu, residual=None):
    """act((a @ b) + bias [+ residual]).

    a: (M, K) f32 activations, b_bf16: (K, N) bf16 weights (BN scale folded),
    bias: (N,) f32, residual: optional (M, Nr) f32 with Nr <= round_up(N, 128).
    Returns the padded (Mp, Np) f32 result; caller slices rows.  B and bias are
    fully VMEM-resident; the grid streams only A / residual / output row tiles.
    """
    M, K = a.shape
    Kb, N = b_bf16.shape
    assert Kb == K
    Kp = _round_up(K, 128)
    Np = _round_up(N, 128)
    TM = 512 if M >= 512 else _round_up(M, 16)     # 512 cap keeps v7x VMEM happy
    Mp = _round_up(M, TM)

    a_p = jnp.pad(a, ((0, Mp - M), (0, Kp - K))).astype(jnp.bfloat16)
    b_p = jnp.pad(b_bf16, ((0, Kp - K), (0, Np - N)))
    bias_p = jnp.pad(bias.reshape(1, N), ((0, 0), (0, Np - N)))

    grid = (Mp // TM,)
    a_spec = pl.BlockSpec((TM, Kp), lambda i: (i, 0))
    b_spec = pl.BlockSpec((Kp, Np), lambda i: (0, 0))     # resident weights
    s_spec = pl.BlockSpec((1, Np), lambda i: (0, 0))      # resident bias
    o_spec = pl.BlockSpec((TM, Np), lambda i: (i, 0))
    cparams = pltpu.CompilerParams(dimension_semantics=("parallel",))

    if residual is None:
        out = pl.pallas_call(
            functools.partial(_mm_bias_act_kernel, relu=relu),
            out_shape=jax.ShapeDtypeStruct((Mp, Np), jnp.float32),
            grid=grid,
            in_specs=[a_spec, b_spec, s_spec],
            out_specs=o_spec,
            compiler_params=cparams,
        )(a_p, b_p, bias_p)
    else:
        r_p = jnp.pad(residual.astype(jnp.float32),
                      ((0, Mp - M), (0, Np - residual.shape[1])))
        out = pl.pallas_call(
            _mm_bias_residual_relu_kernel,
            out_shape=jax.ShapeDtypeStruct((Mp, Np), jnp.float32),
            grid=grid,
            in_specs=[a_spec, b_spec, s_spec,
                      pl.BlockSpec((TM, Np), lambda i: (i, 0))],
            out_specs=o_spec,
            compiler_params=cparams,
        )(a_p, b_p, bias_p, r_p)
    return out


def conv_bn_act(x, w_bf16, bias, stride, relu, residual=None):
    """Conv2d(padding=k//2) + folded BN + optional ReLU [+ fused residual add+ReLU].

    x: NHWC whose last dim Cx >= cin (extra lanes are zeros and stay zero),
    w_bf16: HWIO weights with BN scale pre-folded.  Output channels are kept
    padded to a multiple of 128 (lane-dense) between layers.
    """
    N, H, W, Cx = x.shape
    kh, kw, cin, cout = w_bf16.shape

    if kh == 1 and kw == 1:
        # Pointwise conv: no im2col, direct (M, Cx) matmul (stride = subsample).
        if stride > 1:
            x = x[:, ::stride, ::stride, :]
        Hout, Wout = x.shape[1], x.shape[2]
        a = x.reshape(N * Hout * Wout, Cx)
        b2 = w_bf16.reshape(cin, cout)
        if Cx > cin:
            b2 = jnp.pad(b2, ((0, Cx - cin), (0, 0)))     # zero rows for zero lanes
    else:
        if Cx > cin:
            x = x[..., :cin]          # drop zero lanes before the im2col blow-up
        pad = kh // 2
        Hout = (H + 2 * pad - kh) // stride + 1
        Wout = (W + 2 * pad - kw) // stride + 1
        xp = jnp.pad(x, ((0, 0), (pad, pad), (pad, pad), (0, 0)))
        # TODO(synk): move im2col into the kernel (halo'd row blocks + pl.ds taps)
        # to avoid materializing the kh*kw-times-larger patch matrix in HBM.
        patches = [
            xp[:, i:i + (Hout - 1) * stride + 1:stride,
                  j:j + (Wout - 1) * stride + 1:stride, :]
            for i in range(kh) for j in range(kw)]
        a = jnp.concatenate(patches, axis=-1).reshape(
            N * Hout * Wout, kh * kw * cin)
        b2 = w_bf16.reshape(kh * kw * cin, cout)

    M = N * Hout * Wout
    r2 = None if residual is None else residual.reshape(M, residual.shape[-1])
    out = matmul_bias_act(a, b2, bias, relu=relu, residual=r2)
    return out[:M].reshape(N, Hout, Wout, out.shape[-1])


def maxpool_3x3_s2(x):
    """MaxPool2d(kernel_size=3, stride=2, padding=1) on NHWC input (C lane-padded)."""
    N, H, W, C = x.shape
    stride, pad = 2, 1
    Hout = (H + 2 * pad - 3) // stride + 1
    Wout = (W + 2 * pad - 3) // stride + 1
    xp = jnp.pad(x, ((0, 0), (pad, pad), (pad, pad), (0, 0)),
                 constant_values=-jnp.inf)
    wins = [xp[:, i:i + (Hout - 1) * stride + 1:stride,
                  j:j + (Wout - 1) * stride + 1:stride, :]
            for i in range(3) for j in range(3)]
    M = N * Hout * Wout
    stack = jnp.stack(wins, 0).reshape(9, M, C)

    Cp = _round_up(C, 128)
    TMR = 512 if M >= 512 else _round_up(M, 8)
    Mp = _round_up(M, TMR)
    stack = jnp.pad(stack, ((0, 0), (0, Mp - M), (0, Cp - C)),
                    constant_values=-jnp.inf)
    out = pl.pallas_call(
        _max9_kernel,
        out_shape=jax.ShapeDtypeStruct((Mp, Cp), jnp.float32),
        grid=(Mp // TMR,),
        in_specs=[pl.BlockSpec((9, TMR, Cp), lambda i: (0, i, 0))],
        out_specs=pl.BlockSpec((TMR, Cp), lambda i: (i, 0)),
        compiler_params=pltpu.CompilerParams(dimension_semantics=("parallel",)),
    )(stack)
    return out[:M, :C].reshape(N, Hout, Wout, C)


# ------------------------- parameter synthesis -------------------------

def _fold_bn(key, c, eps=1e-5):
    k1, k2, k3, k4 = jax.random.split(key, 4)
    gamma = jax.random.uniform(k1, (c,), minval=0.5, maxval=1.5, dtype=jnp.float32)
    beta = 0.1 * jax.random.normal(k2, (c,), dtype=jnp.float32)
    mean = 0.1 * jax.random.normal(k3, (c,), dtype=jnp.float32)
    var = jax.random.uniform(k4, (c,), minval=0.5, maxval=1.5, dtype=jnp.float32)
    scale = gamma * jax.lax.rsqrt(var + eps)
    bias = beta - mean * scale
    return scale, bias


def _conv_bn_params(key, k, cin, cout):
    kw_, kb = jax.random.split(key)
    w = 0.05 * jax.random.normal(kw_, (k, k, cin, cout), dtype=jnp.float32)  # HWIO
    scale, bias = _fold_bn(kb, cout)
    # Fold BN scale into the weight columns; store weights in bf16 for the MXU.
    w_folded = (w * scale).astype(jnp.bfloat16)
    return {"w": w_folded, "b": bias}


def init_backbone_params(key):
    keys = jax.random.split(key, 13)
    params = {
        "stem": _conv_bn_params(keys[0], 7, 3, 32),
        # layer1: 32 -> (32, 32) -> 128, stride 1 (projection shortcut)
        "l1": {"c1": _conv_bn_params(keys[1], 1, 32, 32),
               "c2": _conv_bn_params(keys[2], 3, 32, 32),
               "c3": _conv_bn_params(keys[3], 1, 32, 128),
               "ds": _conv_bn_params(keys[4], 1, 32, 128),
               "stride": 1},
        # layer2: 128 -> (64, 64) -> 256, stride 2
        "l2": {"c1": _conv_bn_params(keys[5], 1, 128, 64),
               "c2": _conv_bn_params(keys[6], 3, 64, 64),
               "c3": _conv_bn_params(keys[7], 1, 64, 256),
               "ds": _conv_bn_params(keys[8], 1, 128, 256),
               "stride": 2},
        # layer3: 256 -> (256, 256) -> 1024, stride 2  (out_channels = 1024)
        "l3": {"c1": _conv_bn_params(keys[9], 1, 256, 256),
               "c2": _conv_bn_params(keys[10], 3, 256, 256),
               "c3": _conv_bn_params(keys[11], 1, 256, 1024),
               "ds": _conv_bn_params(keys[12], 1, 256, 1024),
               "stride": 2},
    }
    return params


# ------------------------- forward pass -------------------------

def _bottleneck(x, bp):
    stride = bp["stride"]
    identity = conv_bn_act(x, bp["ds"]["w"], bp["ds"]["b"], stride, False)
    out = conv_bn_act(x, bp["c1"]["w"], bp["c1"]["b"], 1, True)
    out = conv_bn_act(out, bp["c2"]["w"], bp["c2"]["b"], stride, True)
    # residual add + ReLU fused into the final 1x1 conv's matmul epilogue
    out = conv_bn_act(out, bp["c3"]["w"], bp["c3"]["b"], 1, False,
                      residual=identity)
    return out


def faster_rcnn_backbone_forward(params, x_nchw):
    """Equivalent of FasterRCNN_Backbone.forward: OrderedDict([['feat2rpn', feat]])."""
    x = jnp.transpose(x_nchw, (0, 2, 3, 1)).astype(jnp.float32)   # NCHW -> NHWC
    sp = params["stem"]
    x = conv_bn_act(x, sp["w"], sp["b"], 2, True)                  # conv1 7x7/2 + BN + ReLU
    x = maxpool_3x3_s2(x)                                          # maxpool 3x3/2
    x = _bottleneck(x, params["l1"])                               # layer1
    x = _bottleneck(x, params["l2"])                               # layer2
    x = _bottleneck(x, params["l3"])                               # layer3 -> 1024 channels
    feat2rpn = jnp.transpose(x, (0, 3, 1, 2))                      # NHWC -> NCHW (C = 1024 exact)
    return OrderedDict([["feat2rpn", feat2rpn]])


if __name__ == "__main__":
    key = jax.random.PRNGKey(0)
    pkey, xkey = jax.random.split(key)
    params = init_backbone_params(pkey)
    x = jax.random.normal(xkey, (2, 3, 32, 32), dtype=jnp.float32)  # NCHW, like PyTorch
    out = faster_rcnn_backbone_forward(params, x)
    feat = jax.block_until_ready(out["feat2rpn"])
    assert feat.shape == (2, 1024, 2, 2), feat.shape
    assert feat.dtype == jnp.float32
    assert bool(jnp.all(jnp.isfinite(feat)))
    print("KERNEL_OK")
</pallas_src>

<mosaic_0001>
module attributes {stable_mosaic.version = 11 : i64} {
  func.func @_mm_bias_act_kernel(%arg0: i32, %arg1: memref<512x256xbf16, #tpu.memory_space<vmem>>, %arg2: memref<256x128xbf16, #tpu.memory_space<vmem>>, %arg3: memref<1x128xf32, #tpu.memory_space<vmem>>, %arg4: memref<512x128xf32, #tpu.memory_space<vmem>>) attributes {dimension_semantics = [#tpu.dimension_semantics<parallel>], iteration_bounds = array<i64: 1>, scalar_prefetch = 0 : i64, scratch_operands = 0 : i64, tpu.core_type = #tpu.core_type<tc>, window_params = [{transform_indices = @transform_0, window_bounds = array<i64: 512, 256>}, {pipeline_mode = #tpu.pipeline_mode<synchronous>, transform_indices = @transform_1, window_bounds = array<i64: 256, 128>}, {pipeline_mode = #tpu.pipeline_mode<synchronous>, transform_indices = @transform_2, window_bounds = array<i64: 1, 128>}, {transform_indices = @transform_3, window_bounds = array<i64: 512, 128>}]} {
    %c0 = arith.constant 0 : index
    %c0_0 = arith.constant 0 : index
    %0 = vector.load %arg1[%c0, %c0_0] : memref<512x256xbf16, #tpu.memory_space<vmem>>, vector<512x256xbf16>
    %c0_1 = arith.constant 0 : index
    %c0_2 = arith.constant 0 : index
    %1 = vector.load %arg2[%c0_1, %c0_2] : memref<256x128xbf16, #tpu.memory_space<vmem>>, vector<256x128xbf16>
    %cst = arith.constant dense<0.000000e+00> : vector<512x128xf32>
    %2 = tpu.matmul %0, %1, %cst {dimension_numbers = #tpu.dot_dimension_numbers<[1], [0], [0], [1], [0, 0, 1, 1], [], []>} : vector<512x256xbf16>, vector<256x128xbf16>, vector<512x128xf32> -> vector<512x128xf32>
    %c0_3 = arith.constant 0 : index
    %c0_4 = arith.constant 0 : index
    %3 = vector.load %arg3[%c0_3, %c0_4] : memref<1x128xf32, #tpu.memory_space<vmem>>, vector<1x128xf32>
    %4 = vector.broadcast %3 : vector<1x128xf32> to vector<512x128xf32>
    %5 = arith.addf %2, %4 : vector<512x128xf32>
    %cst_5 = arith.constant 0.000000e+00 : f32
    %6 = vector.broadcast %cst_5 : f32 to vector<512x128xf32>
    %7 = arith.maximumf %5, %6 : vector<512x128xf32>
    %c0_6 = arith.constant 0 : index
    %c0_7 = arith.constant 0 : index
    %8 = vector.load %arg4[%c0_6, %c0_7] : memref<512x128xf32, #tpu.memory_space<vmem>>, vector<512x128xf32>
    tpu.vector_store %arg4[%c0_6, %c0_7], %7 {strides = array<i32>} : memref<512x128xf32, #tpu.memory_space<vmem>>, vector<512x128xf32>,
    return
  }
  func.func @transform_0(%arg0: i32) -> (i32, i32) {
    %c0_i32 = arith.constant 0 : i32
    %c0_i32_0 = arith.constant 0 : i32
    return %arg0, %c0_i32 : i32, i32
  }
  func.func @transform_1(%arg0: i32) -> (i32, i32) {
    %c0_i32 = arith.constant 0 : i32
    %c0_i32_0 = arith.constant 0 : i32
    %c0_i32_1 = arith.constant 0 : i32
    return %c0_i32, %c0_i32_0 : i32, i32
  }
  func.func @transform_2(%arg0: i32) -> (i32, i32) {
    %c0_i32 = arith.constant 0 : i32
    %c0_i32_0 = arith.constant 0 : i32
    %c0_i32_1 = arith.constant 0 : i32
    return %c0_i32, %c0_i32_0 : i32, i32
  }
  func.func @transform_3(%arg0: i32) -> (i32, i32) {
    %c0_i32 = arith.constant 0 : i32
    %c0_i32_0 = arith.constant 0 : i32
    return %arg0, %c0_i32 : i32, i32
  }
}

</mosaic_0001>

<llo_original>
// kernel: tpu_custom_call.1
$region0: #{tpu_custom_call.1}
  #allocation0 [shape = 'u32[]', space=smem, size = 0x4, offset = 0x4, fixed_abs, tag = 'smem constant byte address 0x4 - core index']
  #allocation1 [shape = 'u32[144,128]{1,0:T(1,128)}', space=vmem, size = 0x12000, scoped, tag = 'internal scratch']
  %s0 = inlined_call_operand.hbm [shape: bf16[512,256], index: 0, kind: input, shape index: {}]
  %s1 = inlined_call_operand.hbm [shape: bf16[256,128], index: 1, kind: input, shape index: {}]
  %s2 = inlined_call_operand.vmem [shape: f32[1,128], index: 2, kind: input, shape index: {}]
  %s3 = inlined_call_operand.hbm [shape: f32[512,128], index: 3, kind: output, shape index: {}]
  %s4 = sld [smem:[#allocation0]]
  $region30: #{tpu_custom_call.1} parent=0
    _
  %s6 = ssub.s32 1, %s4
  %s7 = scalar_select 0, %s6, %s4
  $region1: #{tpu_custom_call.1} parent=0
    #allocation2 [shape = 'u8[262144]{0}', space=vmem, size = 0x40000, scoped, tag = 'input window, operand 0, single buffered']
    #allocation3 [shape = 's32[1]{0}', space=sflag, size = 0x4, scoped, tag = 'scoped memory for tpu_custom_call.1']
    #allocation4 [shape = 's32[1]{0}', space=sflag, size = 0x4, scoped, tag = 'scoped memory for tpu_custom_call.1']
    #allocation5 [shape = 'u8[65536]{0}', space=vmem, size = 0x10000, scoped, tag = 'input window, operand 1, single buffered']
    #allocation6 [shape = 's32[1]{0}', space=sflag, size = 0x4, scoped, tag = 'scoped memory for tpu_custom_call.1']
    #allocation7 [shape = 'u8[262144]{0}', space=vmem, size = 0x40000, scoped, tag = 'output window, operand 0, single buffered']
    %8 = vsyncpa [#allocation3], 0
    %9 = vsyncpa [#allocation6], 0
    %10 = vsyncpa [#allocation4], 0
    // Predicated region
    $region2: #{tpu_custom_call.1} parent=1 // pred_check
      _
    $region3: #{tpu_custom_call.1} parent=1 // pred_check_branch
      %12 = sbr.rel (0) target = $region5
    $region4: #{tpu_custom_call.1} parent=1 // pred_region
      %s14 = ssub.s32 8192, 8192
      %15 = vsyncadd [#allocation3], %s14
      %s16 = sshll.u32 [#allocation2], 4
      %s17 = int_to_ptr.vmem [resolvable:$true] %s16
      %22 = dma.hbm_to_vmem [thread:$0]  %s0, 8192, %s17, [#allocation3], 128, 128, 8
    $region5: #{tpu_custom_call.1} parent=1 // pred_fallthru
      _
    // Predicated region
    $region6: #{tpu_custom_call.1} parent=1 // pred_check
      _
    $region7: #{tpu_custom_call.1} parent=1 // pred_check_branch
      %24 = sbr.rel (0) target = $region9
    $region8: #{tpu_custom_call.1} parent=1 // pred_region
      %s26 = ssub.s32 2048, 2048
      %27 = vsyncadd [#allocation6], %s26
      %s28 = sshll.u32 [#allocation5], 4
      %s29 = int_to_ptr.vmem [resolvable:$true] %s28
      %34 = dma.hbm_to_vmem [thread:$0]  %s1, 2048, %s29, [#allocation6], 64, 64, 4
    $region9: #{tpu_custom_call.1} parent=1 // pred_fallthru
      _
    // Predicated region
    $region10: #{tpu_custom_call.1} parent=1 // pred_check
      _
    $region11: #{tpu_custom_call.1} parent=1 // pred_check_branch
      %36 = sbr.rel (0) target = $region13
    $region12: #{tpu_custom_call.1} parent=1 // pred_region
      _
    $region13: #{tpu_custom_call.1} parent=1 // pred_fallthru
      _
    // Predicated region
    $region14: #{tpu_custom_call.1} parent=1 // pred_check
      _
    $region15: #{tpu_custom_call.1} parent=1 // pred_check_branch
      %38 = sbr.rel (0) target = $region17
    $region16: #{tpu_custom_call.1} parent=1 // pred_region
      %39 = dma.done [#allocation3], 8192
    $region17: #{tpu_custom_call.1} parent=1 // pred_fallthru
      _
    // Predicated region
    $region18: #{tpu_custom_call.1} parent=1 // pred_check
      _
    $region19: #{tpu_custom_call.1} parent=1 // pred_check_branch
      %41 = sbr.rel (0) target = $region21
    $region20: #{tpu_custom_call.1} parent=1 // pred_region
      %42 = dma.done [#allocation6], 2048
    $region21: #{tpu_custom_call.1} parent=1 // pred_fallthru
      _
    %v44 = vld [vmem:[#allocation2] sm:$0xff]
    %v45 = vld [vmem:[#allocation2 + $0x8] sm:$0xff]
    %v46 = vld [vmem:[#allocation2 + $0x10] sm:$0xff]
    %v47 = vld [vmem:[#allocation2 + $0x18] sm:$0xff]
    %v48 = vld [vmem:[#allocation2 + $0x20] sm:$0xff]
    %v49 = vld [vmem:[#allocation2 + $0x28] sm:$0xff]
    %v50 = vld [vmem:[#allocation2 + $0x30] sm:$0xff]
    %v51 = vld [vmem:[#allocation2 + $0x38] sm:$0xff]
    %v52 = vld [vmem:[#allocation2 + $0x40] sm:$0xff]
    %v53 = vld [vmem:[#allocation2 + $0x48] sm:$0xff]
    %v54 = vld [vmem:[#allocation2 + $0x50] sm:$0xff]
    %v55 = vld [vmem:[#allocation2 + $0x58] sm:$0xff]
    %v56 = vld [vmem:[#allocation2 + $0x60] sm:$0xff]
    %v57 = vld [vmem:[#allocation2 + $0x68] sm:$0xff]
    %v58 = vld [vmem:[#allocation2 + $0x70] sm:$0xff]
    %v59 = vld [vmem:[#allocation2 + $0x78] sm:$0xff]
    %v60 = vld [vmem:[#allocation2 + $0x80] sm:$0xff]
    %v61 = vld [vmem:[#allocation2 + $0x88] sm:$0xff]
    %v62 = vld [vmem:[#allocation2 + $0x90] sm:$0xff]
    %v63 = vld [vmem:[#allocation2 + $0x98] sm:$0xff]
    %v64 = vld [vmem:[#allocation2 + $0xa0] sm:$0xff]
    %v65 = vld [vmem:[#allocation2 + $0xa8] sm:$0xff]
    %v66 = vld [vmem:[#allocation2 + $0xb0] sm:$0xff]
    %v67 = vld [vmem:[#allocation2 + $0xb8] sm:$0xff]
    %v68 = vld [vmem:[#allocation2 + $0xc0] sm:$0xff]
    %v69 = vld [vmem:[#allocation2 + $0xc8] sm:$0xff]
    %v70 = vld [vmem:[#allocation2 + $0xd0] sm:$0xff]
    %v71 = vld [vmem:[#allocation2 + $0xd8] sm:$0xff]
    %v72 = vld [vmem:[#allocation2 + $0xe0] sm:$0xff]
    %v73 = vld [vmem:[#allocation2 + $0xe8] sm:$0xff]
    %v74 = vld [vmem:[#allocation2 + $0xf0] sm:$0xff]
    %v75 = vld [vmem:[#allocation2 + $0xf8] sm:$0xff]
    %v76 = vld [vmem:[#allocation2 + $0x100] sm:$0xff]
    %v77 = vld [vmem:[#allocation2 + $0x108] sm:$0xff]
    %v78 = vld [vmem:[#allocation2 + $0x110] sm:$0xff]
    %v79 = vld [vmem:[#allocation2 + $0x118] sm:$0xff]
    %v80 = vld [vmem:[#allocation2 + $0x120] sm:$0xff]
    %v81 = vld [vmem:[#allocation2 + $0x128] sm:$0xff]
    %v82 = vld [vmem:[#allocation2 + $0x130] sm:$0xff]
    %v83 = vld [vmem:[#allocation2 + $0x138] sm:$0xff]
    %v84 = vld [vmem:[#allocation2 + $0x140] sm:$0xff]
    %v85 = vld [vmem:[#allocation2 + $0x148] sm:$0xff]
    %v86 = vld [vmem:[#allocation2 + $0x150] sm:$0xff]
    %v87 = vld [vmem:[#allocation2 + $0x158] sm:$0xff]
    %v88 = vld [vmem:[#allocation2 + $0x160] sm:$0xff]
    %v89 = vld [vmem:[#allocation2 + $0x168] sm:$0xff]
    %v90 = vld [vmem:[#allocation2 + $0x170] sm:$0xff]
    %v91 = vld [vmem:[#allocation2 + $0x178] sm:$0xff]
    %v92 = vld [vmem:[#allocation2 + $0x180] sm:$0xff]
    %v93 = vld [vmem:[#allocation2 + $0x188] sm:$0xff]
    %v94 = vld [vmem:[#allocation2 + $0x190] sm:$0xff]
    %v95 = vld [vmem:[#allocation2 + $0x198] sm:$0xff]
    %v96 = vld [vmem:[#allocation2 + $0x1a0] sm:$0xff]
    %v97 = vld [vmem:[#allocation2 + $0x1a8] sm:$0xff]
    %v98 = vld [vmem:[#allocation2 + $0x1b0] sm:$0xff]
    %v99 = vld [vmem:[#allocation2 + $0x1b8] sm:$0xff]
    %v100 = vld [vmem:[#allocation2 + $0x1c0] sm:$0xff]
    %v101 = vld [vmem:[#allocation2 + $0x1c8] sm:$0xff]
    %v102 = vld [vmem:[#allocation2 + $0x1d0] sm:$0xff]
    %v103 = vld [vmem:[#allocation2 + $0x1d8] sm:$0xff]
    %v104 = vld [vmem:[#allocation2 + $0x1e0] sm:$0xff]
    %v105 = vld [vmem:[#allocation2 + $0x1e8] sm:$0xff]
    %v106 = vld [vmem:[#allocation2 + $0x1f0] sm:$0xff]
    %v107 = vld [vmem:[#allocation2 + $0x1f8] sm:$0xff]
    %v108 = vld [vmem:[#allocation5] sm:$0xf]
    %v109 = vld [vmem:[#allocation5 + $0x4] sm:$0xf]
    %v110 = vld [vmem:[#allocation5 + $0x8] sm:$0xf]
    %v111 = vld [vmem:[#allocation5 + $0xc] sm:$0xf]
    %v112 = vld [vmem:[#allocation5 + $0x10] sm:$0xf]
    %v113 = vld [vmem:[#allocation5 + $0x14] sm:$0xf]
    %v114 = vld [vmem:[#allocation5 + $0x18] sm:$0xf]
    %v115 = vld [vmem:[#allocation5 + $0x1c] sm:$0xf]
    %v116 = vld [vmem:[#allocation5 + $0x20] sm:$0xf]
    %v117 = vld [vmem:[#allocation5 + $0x24] sm:$0xf]
    %v118 = vld [vmem:[#allocation5 + $0x28] sm:$0xf]
    %v119 = vld [vmem:[#allocation5 + $0x2c] sm:$0xf]
    %v120 = vld [vmem:[#allocation5 + $0x30] sm:$0xf]
    %v121 = vld [vmem:[#allocation5 + $0x34] sm:$0xf]
    %v122 = vld [vmem:[#allocation5 + $0x38] sm:$0xf]
    %v123 = vld [vmem:[#allocation5 + $0x3c] sm:$0xf]
    %v124 = vld [vmem:[#allocation5 + $0x40] sm:$0xf]
    %v125 = vld [vmem:[#allocation5 + $0x44] sm:$0xf]
    %v126 = vld [vmem:[#allocation5 + $0x48] sm:$0xf]
    %v127 = vld [vmem:[#allocation5 + $0x4c] sm:$0xf]
    %v128 = vld [vmem:[#allocation5 + $0x50] sm:$0xf]
    %v129 = vld [vmem:[#allocation5 + $0x54] sm:$0xf]
    %v130 = vld [vmem:[#allocation5 + $0x58] sm:$0xf]
    %v131 = vld [vmem:[#allocation5 + $0x5c] sm:$0xf]
    %v132 = vld [vmem:[#allocation5 + $0x60] sm:$0xf]
    %v133 = vld [vmem:[#allocation5 + $0x64] sm:$0xf]
    %v134 = vld [vmem:[#allocation5 + $0x68] sm:$0xf]
    %v135 = vld [vmem:[#allocation5 + $0x6c] sm:$0xf]
    %v136 = vld [vmem:[#allocation5 + $0x70] sm:$0xf]
    %v137 = vld [vmem:[#allocation5 + $0x74] sm:$0xf]
    %v138 = vld [vmem:[#allocation5 + $0x78] sm:$0xf]
    %v139 = vld [vmem:[#allocation5 + $0x7c] sm:$0xf]
    %v140 = vld [vmem:[%s2] sm:$0x1]
    %v142 = vlaneseq
    %v143 = vshrl.u32 %v142, 7
    %v144 = vsub.s32 0, %v143
    %v145 = vrot.slane %v140, %v144
    %v211 = vunpack.c.l.b16 %v44
    %v212 = vunpack.c.h.b16 %v44
    %v213 = vunpack.c.l.b16 %v45
    %v214 = vunpack.c.h.b16 %v45
    %v215 = vunpack.c.l.b16 %v46
    %v216 = vunpack.c.h.b16 %v46
    %v217 = vunpack.c.l.b16 %v47
    %v218 = vunpack.c.h.b16 %v47
    %v219 = vunpack.c.l.b16 %v48
    %v220 = vunpack.c.h.b16 %v48
    %v221 = vunpack.c.l.b16 %v49
    %v222 = vunpack.c.h.b16 %v49
    %v223 = vunpack.c.l.b16 %v50
    %v224 = vunpack.c.h.b16 %v50
    %v225 = vunpack.c.l.b16 %v51
    %v226 = vunpack.c.h.b16 %v51
    %v227 = vunpack.c.l.b16 %v52
    %v228 = vunpack.c.h.b16 %v52
    %v229 = vunpack.c.l.b16 %v53
    %v230 = vunpack.c.h.b16 %v53
    %v231 = vunpack.c.l.b16 %v54
    %v232 = vunpack.c.h.b16 %v54
    %v233 = vunpack.c.l.b16 %v55
    %v234 = vunpack.c.h.b16 %v55
    %v235 = vunpack.c.l.b16 %v56
    %v236 = vunpack.c.h.b16 %v56
    %v237 = vunpack.c.l.b16 %v57
    %v238 = vunpack.c.h.b16 %v57
    %v239 = vunpack.c.l.b16 %v58
    %v240 = vunpack.c.h.b16 %v58
    %v241 = vunpack.c.l.b16 %v59
    %v242 = vunpack.c.h.b16 %v59
    %v243 = vunpack.c.l.b16 %v60
    %v244 = vunpack.c.h.b16 %v60
    %v245 = vunpack.c.l.b16 %v61
    %v246 = vunpack.c.h.b16 %v61
    %v247 = vunpack.c.l.b16 %v62
    %v248 = vunpack.c.h.b16 %v62
    %v249 = vunpack.c.l.b16 %v63
    %v250 = vunpack.c.h.b16 %v63
    %v251 = vunpack.c.l.b16 %v64
    %v252 = vunpack.c.h.b16 %v64
    %v253 = vunpack.c.l.b16 %v65
    %v254 = vunpack.c.h.b16 %v65
    %v255 = vunpack.c.l.b16 %v66
    %v256 = vunpack.c.h.b16 %v66
    %v257 = vunpack.c.l.b16 %v67
    %v258 = vunpack.c.h.b16 %v67
    %v259 = vunpack.c.l.b16 %v68
    %v260 = vunpack.c.h.b16 %v68
    %v261 = vunpack.c.l.b16 %v69
    %v262 = vunpack.c.h.b16 %v69
    %v263 = vunpack.c.l.b16 %v70
    %v264 = vunpack.c.h.b16 %v70
    %v265 = vunpack.c.l.b16 %v71
    %v266 = vunpack.c.h.b16 %v71
    %v267 = vunpack.c.l.b16 %v72
    %v268 = vunpack.c.h.b16 %v72
    %v269 = vunpack.c.l.b16 %v73
    %v270 = vunpack.c.h.b16 %v73
    %v271 = vunpack.c.l.b16 %v74
    %v272 = vunpack.c.h.b16 %v74
    %v273 = vunpack.c.l.b16 %v75
    %v274 = vunpack.c.h.b16 %v75
    %v275 = vunpack.c.l.b16 %v76
    %v276 = vunpack.c.h.b16 %v76
    %v277 = vunpack.c.l.b16 %v77
    %v278 = vunpack.c.h.b16 %v77
    %v279 = vunpack.c.l.b16 %v78
    %v280 = vunpack.c.h.b16 %v78
    %v281 = vunpack.c.l.b16 %v79
    %v282 = vunpack.c.h.b16 %v79
    %v283 = vunpack.c.l.b16 %v80
    %v284 = vunpack.c.h.b16 %v80
    %v285 = vunpack.c.l.b16 %v81
    %v286 = vunpack.c.h.b16 %v81
    %v287 = vunpack.c.l.b16 %v82
    %v288 = vunpack.c.h.b16 %v82
    %v289 = vunpack.c.l.b16 %v83
    %v290 = vunpack.c.h.b16 %v83
    %v291 = vunpack.c.l.b16 %v84
    %v292 = vunpack.c.h.b16 %v84
    %v293 = vunpack.c.l.b16 %v85
    %v294 = vunpack.c.h.b16 %v85
    %v295 = vunpack.c.l.b16 %v86
    %v296 = vunpack.c.h.b16 %v86
    %v297 = vunpack.c.l.b16 %v87
    %v298 = vunpack.c.h.b16 %v87
    %v299 = vunpack.c.l.b16 %v88
    %v300 = vunpack.c.h.b16 %v88
    %v301 = vunpack.c.l.b16 %v89
    %v302 = vunpack.c.h.b16 %v89
    %v303 = vunpack.c.l.b16 %v90
    %v304 = vunpack.c.h.b16 %v90
    %v305 = vunpack.c.l.b16 %v91
    %v306 = vunpack.c.h.b16 %v91
    %v307 = vunpack.c.l.b16 %v92
    %v308 = vunpack.c.h.b16 %v92
    %v309 = vunpack.c.l.b16 %v93
    %v310 = vunpack.c.h.b16 %v93
    %v311 = vunpack.c.l.b16 %v94
    %v312 = vunpack.c.h.b16 %v94
    %v313 = vunpack.c.l.b16 %v95
    %v314 = vunpack.c.h.b16 %v95
    %v315 = vunpack.c.l.b16 %v96
    %v316 = vunpack.c.h.b16 %v96
    %v317 = vunpack.c.l.b16 %v97
    %v318 = vunpack.c.h.b16 %v97
    %v319 = vunpack.c.l.b16 %v98
    %v320 = vunpack.c.h.b16 %v98
    %v321 = vunpack.c.l.b16 %v99
    %v322 = vunpack.c.h.b16 %v99
    %v323 = vunpack.c.l.b16 %v100
    %v324 = vunpack.c.h.b16 %v100
    %v325 = vunpack.c.l.b16 %v101
    %v326 = vunpack.c.h.b16 %v101
    %v327 = vunpack.c.l.b16 %v102
    %v328 = vunpack.c.h.b16 %v102
    %v329 = vunpack.c.l.b16 %v103
    %v330 = vunpack.c.h.b16 %v103
    %v331 = vunpack.c.l.b16 %v104
    %v332 = vunpack.c.h.b16 %v104
    %v333 = vunpack.c.l.b16 %v105
    %v334 = vunpack.c.h.b16 %v105
    %v335 = vunpack.c.l.b16 %v106
    %v336 = vunpack.c.h.b16 %v106
    %v337 = vunpack.c.l.b16 %v107
    %v338 = vunpack.c.h.b16 %v107
    %v339 = vpack.c.b16 %v213, %v211
    %v340 = vpack.c.b16 %v214, %v212
    %v341 = vpack.c.b16 %v217, %v215
    %v342 = vpack.c.b16 %v218, %v216
    %v343 = vpack.c.b16 %v221, %v219
    %v344 = vpack.c.b16 %v222, %v220
    %v345 = vpack.c.b16 %v225, %v223
    %v346 = vpack.c.b16 %v226, %v224
    %v347 = vpack.c.b16 %v229, %v227
    %v348 = vpack.c.b16 %v230, %v228
    %v349 = vpack.c.b16 %v233, %v231
    %v350 = vpack.c.b16 %v234, %v232
    %v351 = vpack.c.b16 %v237, %v235
    %v352 = vpack.c.b16 %v238, %v236
    %v353 = vpack.c.b16 %v241, %v239
    %v354 = vpack.c.b16 %v242, %v240
    %v355 = vpack.c.b16 %v245, %v243
    %v356 = vpack.c.b16 %v246, %v244
    %v357 = vpack.c.b16 %v249, %v247
    %v358 = vpack.c.b16 %v250, %v248
    %v359 = vpack.c.b16 %v253, %v251
    %v360 = vpack.c.b16 %v254, %v252
    %v361 = vpack.c.b16 %v257, %v255
    %v362 = vpack.c.b16 %v258, %v256
    %v363 = vpack.c.b16 %v261, %v259
    %v364 = vpack.c.b16 %v262, %v260
    %v365 = vpack.c.b16 %v265, %v263
    %v366 = vpack.c.b16 %v266, %v264
    %v367 = vpack.c.b16 %v269, %v267
    %v368 = vpack.c.b16 %v270, %v268
    %v369 = vpack.c.b16 %v273, %v271
    %v370 = vpack.c.b16 %v274, %v272
    %v371 = vpack.c.b16 %v277, %v275
    %v372 = vpack.c.b16 %v278, %v276
    %v373 = vpack.c.b16 %v281, %v279
    %v374 = vpack.c.b16 %v282, %v280
    %v375 = vpack.c.b16 %v285, %v283
    %v376 = vpack.c.b16 %v286, %v284
    %v377 = vpack.c.b16 %v289, %v287
    %v378 = vpack.c.b16 %v290, %v288
    %v379 = vpack.c.b16 %v293, %v291
    %v380 = vpack.c.b16 %v294, %v292
    %v381 = vpack.c.b16 %v297, %v295
    %v382 = vpack.c.b16 %v298, %v296
    %v383 = vpack.c.b16 %v301, %v299
    %v384 = vpack.c.b16 %v302, %v300
    %v385 = vpack.c.b16 %v305, %v303
    %v386 = vpack.c.b16 %v306, %v304
    %v387 = vpack.c.b16 %v309, %v307
    %v388 = vpack.c.b16 %v310, %v308
    %v389 = vpack.c.b16 %v313, %v311
    %v390 = vpack.c.b16 %v314, %v312
    %v391 = vpack.c.b16 %v317, %v315
    %v392 = vpack.c.b16 %v318, %v316
    %v393 = vpack.c.b16 %v321, %v319
    %v394 = vpack.c.b16 %v322, %v320
    %v395 = vpack.c.b16 %v325, %v323
    %v396 = vpack.c.b16 %v326, %v324
    %v397 = vpack.c.b16 %v329, %v327
    %v398 = vpack.c.b16 %v330, %v328
    %v399 = vpack.c.b16 %v333, %v331
    %v400 = vpack.c.b16 %v334, %v332
    %v401 = vpack.c.b16 %v337, %v335
    %v402 = vpack.c.b16 %v338, %v336
    %v499 = vunpack.c.l.b16 %v108
    %v500 = vunpack.c.l.b16 %v109
    %v501 = vunpack.c.l.b16 %v110
    %v502 = vunpack.c.l.b16 %v111
    %v503 = vunpack.c.l.b16 %v112
    %v504 = vunpack.c.l.b16 %v113
    %v505 = vunpack.c.l.b16 %v114
    %v506 = vunpack.c.l.b16 %v115
    %v507 = vunpack.c.l.b16 %v116
    %v508 = vunpack.c.l.b16 %v117
    %v509 = vunpack.c.l.b16 %v118
    %v510 = vunpack.c.l.b16 %v119
    %v511 = vunpack.c.l.b16 %v120
    %v512 = vunpack.c.l.b16 %v121
    %v513 = vunpack.c.l.b16 %v122
    %v514 = vunpack.c.l.b16 %v123
    %v515 = vunpack.c.l.b16 %v124
    %v516 = vunpack.c.l.b16 %v125
    %v517 = vunpack.c.l.b16 %v126
    %v518 = vunpack.c.l.b16 %v127
    %v519 = vunpack.c.l.b16 %v128
    %v520 = vunpack.c.l.b16 %v129
    %v521 = vunpack.c.l.b16 %v130
    %v522 = vunpack.c.l.b16 %v131
    %v523 = vunpack.c.l.b16 %v132
    %v524 = vunpack.c.l.b16 %v133
    %v525 = vunpack.c.l.b16 %v134
    %v526 = vunpack.c.l.b16 %v135
    %v527 = vunpack.c.l.b16 %v136
    %v528 = vunpack.c.l.b16 %v137
    %v529 = vunpack.c.l.b16 %v138
    %v530 = vunpack.c.l.b16 %v139
    %v531 = vpack.c.b16 %v500, %v499
    %v532 = vpack.c.b16 %v502, %v501
    %v533 = vpack.c.b16 %v504, %v503
    %v534 = vpack.c.b16 %v506, %v505
    %v535 = vpack.c.b16 %v508, %v507
    %v536 = vpack.c.b16 %v510, %v509
    %v537 = vpack.c.b16 %v512, %v511
    %v538 = vpack.c.b16 %v514, %v513
    %v539 = vpack.c.b16 %v516, %v515
    %v540 = vpack.c.b16 %v518, %v517
    %v541 = vpack.c.b16 %v520, %v519
    %v542 = vpack.c.b16 %v522, %v521
    %v543 = vpack.c.b16 %v524, %v523
    %v544 = vpack.c.b16 %v526, %v525
    %v545 = vpack.c.b16 %v528, %v527
    %v546 = vpack.c.b16 %v530, %v529
    %563 = vmatprep.subr.bf16.mxu0 0
    %564 = vmatpush1.bf16.msra.mxu0 %v531
    %565 = vmatprep.subr.bf16.mxu0 0
    %566 = vmatpush1.bf16.msra.mxu0 %v532
    %567 = vmatprep.subr.bf16.mxu0 0
    %568 = vmatpush1.bf16.msra.mxu0 %v533
    %569 = vmatprep.subr.bf16.mxu0 0
    %570 = vmatpush1.bf16.msra.mxu0 %v534
    %571 = vmatprep.subr.bf16.mxu0 0
    %572 = vmatpush1.bf16.msra.mxu0 %v535
    %573 = vmatprep.subr.bf16.mxu0 0
    %574 = vmatpush1.bf16.msra.mxu0 %v536
    %575 = vmatprep.subr.bf16.mxu0 0
    %576 = vmatpush1.bf16.msra.mxu0 %v537
    %577 = vmatprep.subr.bf16.mxu0 0
    %578 = vmatpush1.bf16.msra.mxu0 %v538
    %579 = vmatprep.subr.bf16.mxu0 0
    %580 = vmatpush1.bf16.msra.mxu0 %v539
    %581 = vmatprep.subr.bf16.mxu0 0
    %582 = vmatpush1.bf16.msra.mxu0 %v540
    %583 = vmatprep.subr.bf16.mxu0 0
    %584 = vmatpush1.bf16.msra.mxu0 %v541
    %585 = vmatprep.subr.bf16.mxu0 0
    %586 = vmatpush1.bf16.msra.mxu0 %v542
    %587 = vmatprep.subr.bf16.mxu0 0
    %588 = vmatpush1.bf16.msra.mxu0 %v543
    %589 = vmatprep.subr.bf16.mxu0 0
    %590 = vmatpush1.bf16.msra.mxu0 %v544
    %591 = vmatprep.subr.bf16.mxu0 0
    %592 = vmatpush1.bf16.msra.mxu0 %v545
    %593 = vmatprep.subr.bf16.mxu0 0
    %594 = vmatpush1.bf16.msra.mxu0 %v546
    %595 = vmatprep.mubr.bf16.mxu0 %v340
    %596 = vmatmul.mubr.bf16.gmra.mrb[0].mxu0 %v339
    %v597 = vpop.f32.mrb[0].mxu0
    %v598 = vadd.f32 %v145, %v597
    %v599 = vpop.f32.mrb[0].mxu0
    %v600 = vpop.f32.mrb[0].mxu0
    %v601 = vadd.f32 %v145, %v600
    %v602 = vpop.f32.mrb[0].mxu0
    %603 = vmatprep.mubr.bf16.mxu0 %v342
    %604 = vmatmul.mubr.bf16.gmra.mrb[0].mxu0 %v341
    %v605 = vpop.f32.mrb[0].mxu0
    %v606 = vadd.f32 %v145, %v605
    %v607 = vpop.f32.mrb[0].mxu0
    %v608 = vpop.f32.mrb[0].mxu0
    %v609 = vadd.f32 %v145, %v608
    %v610 = vpop.f32.mrb[0].mxu0
    %611 = vmatprep.mubr.bf16.mxu0 %v344
    %612 = vmatmul.mubr.bf16.gmra.mrb[0].mxu0 %v343
    %v613 = vpop.f32.mrb[0].mxu0
    %v614 = vadd.f32 %v145, %v613
    %v615 = vpop.f32.mrb[0].mxu0
    %v616 = vpop.f32.mrb[0].mxu0
    %v617 = vadd.f32 %v145, %v616
    %v618 = vpop.f32.mrb[0].mxu0
    %619 = vmatprep.mubr.bf16.mxu0 %v346
    %620 = vmatmul.mubr.bf16.gmra.mrb[0].mxu0 %v345
    %v621 = vpop.f32.mrb[0].mxu0
    %v622 = vadd.f32 %v145, %v621
    %v623 = vpop.f32.mrb[0].mxu0
    %v624 = vpop.f32.mrb[0].mxu0
    %v625 = vadd.f32 %v145, %v624
    %v626 = vpop.f32.mrb[0].mxu0
    %627 = vmatprep.mubr.bf16.mxu0 %v348
    %628 = vmatmul.mubr.bf16.gmra.mrb[0].mxu0 %v347
    %v629 = vpop.f32.mrb[0].mxu0
    %v630 = vadd.f32 %v145, %v629
    %v631 = vpop.f32.mrb[0].mxu0
    %v632 = vpop.f32.mrb[0].mxu0
    %v633 = vadd.f32 %v145, %v632
    %v634 = vpop.f32.mrb[0].mxu0
    %635 = vmatprep.mubr.bf16.mxu0 %v350
    %636 = vmatmul.mubr.bf16.gmra.mrb[0].mxu0 %v349
    %v637 = vpop.f32.mrb[0].mxu0
    %v638 = vadd.f32 %v145, %v637
    %v639 = vpop.f32.mrb[0].mxu0
    %v640 = vpop.f32.mrb[0].mxu0
    %v641 = vadd.f32 %v145, %v640
    %v642 = vpop.f32.mrb[0].mxu0
    %643 = vmatprep.mubr.bf16.mxu0 %v352
    %644 = vmatmul.mubr.bf16.gmra.mrb[0].mxu0 %v351
    %v645 = vpop.f32.mrb[0].mxu0
    %v646 = vadd.f32 %v145, %v645
    %v647 = vpop.f32.mrb[0].mxu0
    %v648 = vpop.f32.mrb[0].mxu0
    %v649 = vadd.f32 %v145, %v648
    %v650 = vpop.f32.mrb[0].mxu0
    %651 = vmatprep.mubr.bf16.mxu0 %v354
    %652 = vmatmul.mubr.bf16.gmra.mrb[0].mxu0 %v353
    %v653 = vpop.f32.mrb[0].mxu0
    %v654 = vadd.f32 %v145, %v653
    %v655 = vpop.f32.mrb[0].mxu0
    %v656 = vpop.f32.mrb[0].mxu0
    %v657 = vadd.f32 %v145, %v656
    %v658 = vpop.f32.mrb[0].mxu0
    %659 = vmatprep.mubr.bf16.mxu0 %v356
    %660 = vmatmul.mubr.bf16.gmra.mrb[0].mxu0 %v355
    %v661 = vpop.f32.mrb[0].mxu0
    %v662 = vadd.f32 %v145, %v661
    %v663 = vpop.f32.mrb[0].mxu0
    %v664 = vpop.f32.mrb[0].mxu0
    %v665 = vadd.f32 %v145, %v664
    %v666 = vpop.f32.mrb[0].mxu0
    %667 = vmatprep.mubr.bf16.mxu0 %v358
    %668 = vmatmul.mubr.bf16.gmra.mrb[0].mxu0 %v357
    %v669 = vpop.f32.mrb[0].mxu0
    %v670 = vadd.f32 %v145, %v669
    %v671 = vpop.f32.mrb[0].mxu0
    %v672 = vpop.f32.mrb[0].mxu0
    %v673 = vadd.f32 %v145, %v672
    %v674 = vpop.f32.mrb[0].mxu0
    %675 = vmatprep.mubr.bf16.mxu0 %v360
    %676 = vmatmul.mubr.bf16.gmra.mrb[0].mxu0 %v359
    %v677 = vpop.f32.mrb[0].mxu0
    %v678 = vadd.f32 %v145, %v677
    %v679 = vpop.f32.mrb[0].mxu0
    %v680 = vpop.f32.mrb[0].mxu0
    %v681 = vadd.f32 %v145, %v680
    %v682 = vpop.f32.mrb[0].mxu0
    %683 = vmatprep.mubr.bf16.mxu0 %v362
    %684 = vmatmul.mubr.bf16.gmra.mrb[0].mxu0 %v361
    %v685 = vpop.f32.mrb[0].mxu0
    %v686 = vadd.f32 %v145, %v685
    %v687 = vpop.f32.mrb[0].mxu0
    %v688 = vpop.f32.mrb[0].mxu0
    %v689 = vadd.f32 %v145, %v688
    %v690 = vpop.f32.mrb[0].mxu0
    %691 = vmatprep.mubr.bf16.mxu0 %v364
    %692 = vmatmul.mubr.bf16.gmra.mrb[0].mxu0 %v363
    %v693 = vpop.f32.mrb[0].mxu0
    %v694 = vadd.f32 %v145, %v693
    %v695 = vpop.f32.mrb[0].mxu0
    %v696 = vpop.f32.mrb[0].mxu0
    %v697 = vadd.f32 %v145, %v696
    %v698 = vpop.f32.mrb[0].mxu0
    %699 = vmatprep.mubr.bf16.mxu0 %v366
    %700 = vmatmul.mubr.bf16.gmra.mrb[0].mxu0 %v365
    %v701 = vpop.f32.mrb[0].mxu0
    %v702 = vadd.f32 %v145, %v701
    %v703 = vpop.f32.mrb[0].mxu0
    %v704 = vpop.f32.mrb[0].mxu0
    %v705 = vadd.f32 %v145, %v704
    %v706 = vpop.f32.mrb[0].mxu0
    %707 = vmatprep.mubr.bf16.mxu0 %v368
    %708 = vmatmul.mubr.bf16.gmra.mrb[0].mxu0 %v367
    %v709 = vpop.f32.mrb[0].mxu0
    %v710 = vadd.f32 %v145, %v709
    %v711 = vpop.f32.mrb[0].mxu0
    %v712 = vpop.f32.mrb[0].mxu0
    %v713 = vadd.f32 %v145, %v712
    %v714 = vpop.f32.mrb[0].mxu0
    %715 = vmatprep.mubr.bf16.mxu0 %v370
    %716 = vmatmul.mubr.bf16.gmra.mrb[0].mxu0 %v369
    %v717 = vpop.f32.mrb[0].mxu0
    %v718 = vadd.f32 %v145, %v717
    %v719 = vpop.f32.mrb[0].mxu0
    %v720 = vpop.f32.mrb[0].mxu0
    %v721 = vadd.f32 %v145, %v720
    %v722 = vpop.f32.mrb[0].mxu0
    %723 = vmatprep.mubr.bf16.mxu0 %v372
    %724 = vmatmul.mubr.bf16.gmra.mrb[0].mxu0 %v371
    %v725 = vpop.f32.mrb[0].mxu0
    %v726 = vadd.f32 %v145, %v725
    %v727 = vpop.f32.mrb[0].mxu0
    %v728 = vpop.f32.mrb[0].mxu0
    %v729 = vadd.f32 %v145, %v728
    %v730 = vpop.f32.mrb[0].mxu0
    %731 = vmatprep.mubr.bf16.mxu0 %v374
    %732 = vmatmul.mubr.bf16.gmra.mrb[0].mxu0 %v373
    %v733 = vpop.f32.mrb[0].mxu0
    %v734 = vadd.f32 %v145, %v733
    %v735 = vpop.f32.mrb[0].mxu0
    %v736 = vpop.f32.mrb[0].mxu0
    %v737 = vadd.f32 %v145, %v736
    %v738 = vpop.f32.mrb[0].mxu0
    %739 = vmatprep.mubr.bf16.mxu0 %v376
    %740 = vmatmul.mubr.bf16.gmra.mrb[0].mxu0 %v375
    %v741 = vpop.f32.mrb[0].mxu0
    %v742 = vadd.f32 %v145, %v741
    %v743 = vpop.f32.mrb[0].mxu0
    %v744 = vpop.f32.mrb[0].mxu0
    %v745 = vadd.f32 %v145, %v744
    %v746 = vpop.f32.mrb[0].mxu0
    %747 = vmatprep.mubr.bf16.mxu0 %v378
    %748 = vmatmul.mubr.bf16.gmra.mrb[0].mxu0 %v377
    %v749 = vpop.f32.mrb[0].mxu0
    %v750 = vadd.f32 %v145, %v749
    %v751 = vpop.f32.mrb[0].mxu0
    %v752 = vpop.f32.mrb[0].mxu0
    %v753 = vadd.f32 %v145, %v752
    %v754 = vpop.f32.mrb[0].mxu0
    %755 = vmatprep.mubr.bf16.mxu0 %v380
    %756 = vmatmul.mubr.bf16.gmra.mrb[0].mxu0 %v379
    %v757 = vpop.f32.mrb[0].mxu0
    %v758 = vadd.f32 %v145, %v757
    %v759 = vpop.f32.mrb[0].mxu0
    %v760 = vpop.f32.mrb[0].mxu0
    %v761 = vadd.f32 %v145, %v760
    %v762 = vpop.f32.mrb[0].mxu0
    %763 = vmatprep.mubr.bf16.mxu0 %v382
    %764 = vmatmul.mubr.bf16.gmra.mrb[0].mxu0 %v381
    %v765 = vpop.f32.mrb[0].mxu0
    %v766 = vadd.f32 %v145, %v765
    %v767 = vpop.f32.mrb[0].mxu0
    %v768 = vpop.f32.mrb[0].mxu0
    %v769 = vadd.f32 %v145, %v768
    %v770 = vpop.f32.mrb[0].mxu0
    %771 = vmatprep.mubr.bf16.mxu0 %v384
    %772 = vmatmul.mubr.bf16.gmra.mrb[0].mxu0 %v383
    %v773 = vpop.f32.mrb[0].mxu0
    %v774 = vadd.f32 %v145, %v773
    %v775 = vpop.f32.mrb[0].mxu0
    %v776 = vpop.f32.mrb[0].mxu0
    %v777 = vadd.f32 %v145, %v776
    %v778 = vpop.f32.mrb[0].mxu0
    %779 = vmatprep.mubr.bf16.mxu0 %v386
    %780 = vmatmul.mubr.bf16.gmra.mrb[0].mxu0 %v385
    %v781 = vpop.f32.mrb[0].mxu0
    %v782 = vadd.f32 %v145, %v781
    %v783 = vpop.f32.mrb[0].mxu0
    %v784 = vpop.f32.mrb[0].mxu0
    %v785 = vadd.f32 %v145, %v784
    %v786 = vpop.f32.mrb[0].mxu0
    %787 = vmatprep.mubr.bf16.mxu0 %v388
    %788 = vmatmul.mubr.bf16.gmra.mrb[0].mxu0 %v387
    %v789 = vpop.f32.mrb[0].mxu0
    %v790 = vadd.f32 %v145, %v789
    %v791 = vpop.f32.mrb[0].mxu0
    %v792 = vpop.f32.mrb[0].mxu0
    %v793 = vadd.f32 %v145, %v792
    %v794 = vpop.f32.mrb[0].mxu0
    %795 = vmatprep.mubr.bf16.mxu0 %v390
    %796 = vmatmul.mubr.bf16.gmra.mrb[0].mxu0 %v389
    %v797 = vpop.f32.mrb[0].mxu0
    %v798 = vadd.f32 %v145, %v797
    %v799 = vpop.f32.mrb[0].mxu0
    %v800 = vpop.f32.mrb[0].mxu0
    %v801 = vadd.f32 %v145, %v800
    %v802 = vpop.f32.mrb[0].mxu0
    %803 = vmatprep.mubr.bf16.mxu0 %v392
    %804 = vmatmul.mubr.bf16.gmra.mrb[0].mxu0 %v391
    %v805 = vpop.f32.mrb[0].mxu0
    %v806 = vadd.f32 %v145, %v805
    %v807 = vpop.f32.mrb[0].mxu0
    %v808 = vpop.f32.mrb[0].mxu0
    %v809 = vadd.f32 %v145, %v808
    %v810 = vpop.f32.mrb[0].mxu0
    %811 = vmatprep.mubr.bf16.mxu0 %v394
    %812 = vmatmul.mubr.bf16.gmra.mrb[0].mxu0 %v393
    %v813 = vpop.f32.mrb[0].mxu0
    %v814 = vadd.f32 %v145, %v813
    %v815 = vpop.f32.mrb[0].mxu0
    %v816 = vpop.f32.mrb[0].mxu0
    %v817 = vadd.f32 %v145, %v816
    %v818 = vpop.f32.mrb[0].mxu0
    %819 = vmatprep.mubr.bf16.mxu0 %v396
    %820 = vmatmul.mubr.bf16.gmra.mrb[0].mxu0 %v395
    %v821 = vpop.f32.mrb[0].mxu0
    %v822 = vadd.f32 %v145, %v821
    %v823 = vpop.f32.mrb[0].mxu0
    %v824 = vpop.f32.mrb[0].mxu0
    %v825 = vadd.f32 %v145, %v824
    %v826 = vpop.f32.mrb[0].mxu0
    %827 = vmatprep.mubr.bf16.mxu0 %v398
    %828 = vmatmul.mubr.bf16.gmra.mrb[0].mxu0 %v397
    %v829 = vpop.f32.mrb[0].mxu0
    %v830 = vadd.f32 %v145, %v829
    %v831 = vpop.f32.mrb[0].mxu0
    %v832 = vpop.f32.mrb[0].mxu0
    %v833 = vadd.f32 %v145, %v832
    %v834 = vpop.f32.mrb[0].mxu0
    %835 = vmatprep.mubr.bf16.mxu0 %v400
    %836 = vmatmul.mubr.bf16.gmra.mrb[0].mxu0 %v399
    %v837 = vpop.f32.mrb[0].mxu0
    %v838 = vadd.f32 %v145, %v837
    %v839 = vpop.f32.mrb[0].mxu0
    %v840 = vpop.f32.mrb[0].mxu0
    %v841 = vadd.f32 %v145, %v840
    %v842 = vpop.f32.mrb[0].mxu0
    %843 = vmatprep.mubr.bf16.mxu0 %v402
    %844 = vmatmul.mubr.bf16.gmra.mrb[0].mxu0 %v401
    %v845 = vpop.f32.mrb[0].mxu0
    %v846 = vadd.f32 %v145, %v845
    %v847 = vpop.f32.mrb[0].mxu0
    %v848 = vpop.f32.mrb[0].mxu0
    %v849 = vadd.f32 %v145, %v848
    %v850 = vpop.f32.mrb[0].mxu0
    %851 = vdwg.mxu0
    %v852 = vmax.f32 %v598, 0.0
    %v853 = vmax.f32 %v601, 0.0
    %v854 = vmax.f32 %v606, 0.0
    %v855 = vmax.f32 %v609, 0.0
    %v856 = vmax.f32 %v614, 0.0
    %v857 = vmax.f32 %v617, 0.0
    %v858 = vmax.f32 %v622, 0.0
    %v859 = vmax.f32 %v625, 0.0
    %v860 = vmax.f32 %v630, 0.0
    %v861 = vmax.f32 %v633, 0.0
    %v862 = vmax.f32 %v638, 0.0
    %v863 = vmax.f32 %v641, 0.0
    %v864 = vmax.f32 %v646, 0.0
    %v865 = vmax.f32 %v649, 0.0
    %v866 = vmax.f32 %v654, 0.0
    %v867 = vmax.f32 %v657, 0.0
    %v868 = vmax.f32 %v662, 0.0
    %v869 = vmax.f32 %v665, 0.0
    %v870 = vmax.f32 %v670, 0.0
    %v871 = vmax.f32 %v673, 0.0
    %v872 = vmax.f32 %v678, 0.0
    %v873 = vmax.f32 %v681, 0.0
    %v874 = vmax.f32 %v686, 0.0
    %v875 = vmax.f32 %v689, 0.0
    %v876 = vmax.f32 %v694, 0.0
    %v877 = vmax.f32 %v697, 0.0
    %v878 = vmax.f32 %v702, 0.0
    %v879 = vmax.f32 %v705, 0.0
    %v880 = vmax.f32 %v710, 0.0
    %v881 = vmax.f32 %v713, 0.0
    %v882 = vmax.f32 %v718, 0.0
    %v883 = vmax.f32 %v721, 0.0
    %v884 = vmax.f32 %v726, 0.0
    %v885 = vmax.f32 %v729, 0.0
    %v886 = vmax.f32 %v734, 0.0
    %v887 = vmax.f32 %v737, 0.0
    %v888 = vmax.f32 %v742, 0.0
    %v889 = vmax.f32 %v745, 0.0
    %v890 = vmax.f32 %v750, 0.0
    %v891 = vmax.f32 %v753, 0.0
    %v892 = vmax.f32 %v758, 0.0
    %v893 = vmax.f32 %v761, 0.0
    %v894 = vmax.f32 %v766, 0.0
    %v895 = vmax.f32 %v769, 0.0
    %v896 = vmax.f32 %v774, 0.0
    %v897 = vmax.f32 %v777, 0.0
    %v898 = vmax.f32 %v782, 0.0
    %v899 = vmax.f32 %v785, 0.0
    %v900 = vmax.f32 %v790, 0.0
    %v901 = vmax.f32 %v793, 0.0
    %v902 = vmax.f32 %v798, 0.0
    %v903 = vmax.f32 %v801, 0.0
    %v904 = vmax.f32 %v806, 0.0
    %v905 = vmax.f32 %v809, 0.0
    %v906 = vmax.f32 %v814, 0.0
    %v907 = vmax.f32 %v817, 0.0
    %v908 = vmax.f32 %v822, 0.0
    %v909 = vmax.f32 %v825, 0.0
    %v910 = vmax.f32 %v830, 0.0
    %v911 = vmax.f32 %v833, 0.0
    %v912 = vmax.f32 %v838, 0.0
    %v913 = vmax.f32 %v841, 0.0
    %v914 = vmax.f32 %v846, 0.0
    %v915 = vmax.f32 %v849, 0.0
    %916 = vst [vmem:[#allocation7] sm:$0xff] %v852
    %917 = vst [vmem:[#allocation7 + $0x8] sm:$0xff] %v853
    %918 = vst [vmem:[#allocation7 + $0x10] sm:$0xff] %v854
    %919 = vst [vmem:[#allocation7 + $0x18] sm:$0xff] %v855
    %920 = vst [vmem:[#allocation7 + $0x20] sm:$0xff] %v856
    %921 = vst [vmem:[#allocation7 + $0x28] sm:$0xff] %v857
    %922 = vst [vmem:[#allocation7 + $0x30] sm:$0xff] %v858
    %923 = vst [vmem:[#allocation7 + $0x38] sm:$0xff] %v859
    %924 = vst [vmem:[#allocation7 + $0x40] sm:$0xff] %v860
    %925 = vst [vmem:[#allocation7 + $0x48] sm:$0xff] %v861
    %926 = vst [vmem:[#allocation7 + $0x50] sm:$0xff] %v862
    %927 = vst [vmem:[#allocation7 + $0x58] sm:$0xff] %v863
    %928 = vst [vmem:[#allocation7 + $0x60] sm:$0xff] %v864
    %929 = vst [vmem:[#allocation7 + $0x68] sm:$0xff] %v865
    %930 = vst [vmem:[#allocation7 + $0x70] sm:$0xff] %v866
    %931 = vst [vmem:[#allocation7 + $0x78] sm:$0xff] %v867
    %932 = vst [vmem:[#allocation7 + $0x80] sm:$0xff] %v868
    %933 = vst [vmem:[#allocation7 + $0x88] sm:$0xff] %v869
    %934 = vst [vmem:[#allocation7 + $0x90] sm:$0xff] %v870
    %935 = vst [vmem:[#allocation7 + $0x98] sm:$0xff] %v871
    %936 = vst [vmem:[#allocation7 + $0xa0] sm:$0xff] %v872
    %937 = vst [vmem:[#allocation7 + $0xa8] sm:$0xff] %v873
    %938 = vst [vmem:[#allocation7 + $0xb0] sm:$0xff] %v874
    %939 = vst [vmem:[#allocation7 + $0xb8] sm:$0xff] %v875
    %940 = vst [vmem:[#allocation7 + $0xc0] sm:$0xff] %v876
    %941 = vst [vmem:[#allocation7 + $0xc8] sm:$0xff] %v877
    %942 = vst [vmem:[#allocation7 + $0xd0] sm:$0xff] %v878
    %943 = vst [vmem:[#allocation7 + $0xd8] sm:$0xff] %v879
    %944 = vst [vmem:[#allocation7 + $0xe0] sm:$0xff] %v880
    %945 = vst [vmem:[#allocation7 + $0xe8] sm:$0xff] %v881
    %946 = vst [vmem:[#allocation7 + $0xf0] sm:$0xff] %v882
    %947 = vst [vmem:[#allocation7 + $0xf8] sm:$0xff] %v883
    %948 = vst [vmem:[#allocation7 + $0x100] sm:$0xff] %v884
    %949 = vst [vmem:[#allocation7 + $0x108] sm:$0xff] %v885
    %950 = vst [vmem:[#allocation7 + $0x110] sm:$0xff] %v886
    %951 = vst [vmem:[#allocation7 + $0x118] sm:$0xff] %v887
    %952 = vst [vmem:[#allocation7 + $0x120] sm:$0xff] %v888
    %953 = vst [vmem:[#allocation7 + $0x128] sm:$0xff] %v889
    %954 = vst [vmem:[#allocation7 + $0x130] sm:$0xff] %v890
    %955 = vst [vmem:[#allocation7 + $0x138] sm:$0xff] %v891
    %956 = vst [vmem:[#allocation7 + $0x140] sm:$0xff] %v892
    %957 = vst [vmem:[#allocation7 + $0x148] sm:$0xff] %v893
    %958 = vst [vmem:[#allocation7 + $0x150] sm:$0xff] %v894
    %959 = vst [vmem:[#allocation7 + $0x158] sm:$0xff] %v895
    %960 = vst [vmem:[#allocation7 + $0x160] sm:$0xff] %v896
    %961 = vst [vmem:[#allocation7 + $0x168] sm:$0xff] %v897
    %962 = vst [vmem:[#allocation7 + $0x170] sm:$0xff] %v898
    %963 = vst [vmem:[#allocation7 + $0x178] sm:$0xff] %v899
    %964 = vst [vmem:[#allocation7 + $0x180] sm:$0xff] %v900
    %965 = vst [vmem:[#allocation7 + $0x188] sm:$0xff] %v901
    %966 = vst [vmem:[#allocation7 + $0x190] sm:$0xff] %v902
    %967 = vst [vmem:[#allocation7 + $0x198] sm:$0xff] %v903
    %968 = vst [vmem:[#allocation7 + $0x1a0] sm:$0xff] %v904
    %969 = vst [vmem:[#allocation7 + $0x1a8] sm:$0xff] %v905
    %970 = vst [vmem:[#allocation7 + $0x1b0] sm:$0xff] %v906
    %971 = vst [vmem:[#allocation7 + $0x1b8] sm:$0xff] %v907
    %972 = vst [vmem:[#allocation7 + $0x1c0] sm:$0xff] %v908
    %973 = vst [vmem:[#allocation7 + $0x1c8] sm:$0xff] %v909
    %974 = vst [vmem:[#allocation7 + $0x1d0] sm:$0xff] %v910
    %975 = vst [vmem:[#allocation7 + $0x1d8] sm:$0xff] %v911
    %976 = vst [vmem:[#allocation7 + $0x1e0] sm:$0xff] %v912
    %977 = vst [vmem:[#allocation7 + $0x1e8] sm:$0xff] %v913
    %978 = vst [vmem:[#allocation7 + $0x1f0] sm:$0xff] %v914
    %979 = vst [vmem:[#allocation7 + $0x1f8] sm:$0xff] %v915
    // Predicated region
    $region22: #{tpu_custom_call.1} parent=1 // pred_check
      _
    $region23: #{tpu_custom_call.1} parent=1 // pred_check_branch
      %981 = sbr.rel (0) target = $region25
    $region24: #{tpu_custom_call.1} parent=1 // pred_region
      %s983 = ssub.s32 8192, 8192
      %984 = vsyncadd [#allocation4], %s983
      %s985 = sshll.u32 [#allocation7], 4
      %s986 = int_to_ptr.vmem [resolvable:$true] %s985
      %991 = dma.vmem_to_hbm [thread:$0]  %s986, 8192, %s3, [#allocation4], 128, 128, 8
    $region25: #{tpu_custom_call.1} parent=1 // pred_fallthru
      _
    // Predicated region
    $region26: #{tpu_custom_call.1} parent=1 // pred_check
      _
    $region27: #{tpu_custom_call.1} parent=1 // pred_check_branch
      %993 = sbr.rel (0) target = $region29
    $region28: #{tpu_custom_call.1} parent=1 // pred_region
      %994 = dma.done [#allocation4], 8192
    $region29: #{tpu_custom_call.1} parent=1 // pred_fallthru
      _
    %995 = vsyncpa [#allocation3], 1
    %996 = vsyncpa [#allocation6], 1
    %997 = vsyncpa [#allocation4], 1

</llo_original>
